<compile_context>
chip_gen: v7x
topology: tpu7x:2x2x1
jax: 0.10.0
libtpu: 0.0.40
codegen_flags: <defaults>
</compile_context>

<pallas_src>
import functools
import math

import jax
import jax.numpy as jnp
from jax.experimental import pallas as pl
from jax.experimental.pallas import tpu as pltpu

EPS = 1e-5


def _round_up(n, m):
    return ((n + m - 1) // m) * m


def _prenorm_residual_kernel(x_ref, xres_ref, gamma_ref, w_ref, b_ref, o_ref,
                             normed_ref):
    # x_ref:      (tm, D)   full-width input rows (layernorm source)
    # xres_ref:   (tm, tn)  residual slice matching this output tile
    # gamma_ref:  (1, D)    layernorm weight
    # w_ref:      (D, tn)   fn = Linear weight column tile, (in_features, out_features)
    # b_ref:      (1, tn)   fn = Linear bias tile
    # o_ref:      (tm, tn)  output tile
    # normed_ref: (tm, D)   scratch: normalized rows cached in matmul dtype

    # LayerNorm is computed once per row tile (inner grid axis j sweeps the
    # output-feature tiles) and cached in VMEM scratch in the MXU input dtype.
    @pl.when(pl.program_id(1) == 0)
    def _():
        x = x_ref[...].astype(jnp.float32)
        mean = jnp.mean(x, axis=-1, keepdims=True)
        centered = x - mean
        var = jnp.mean(centered * centered, axis=-1, keepdims=True)
        scale = jax.lax.rsqrt(var + EPS) * gamma_ref[...].astype(jnp.float32)
        normed_ref[...] = (centered * scale).astype(normed_ref.dtype)

    # fn(normed): model-dtype operands on the MXU, f32 accumulation.
    y = jnp.dot(normed_ref[...], w_ref[...], preferred_element_type=jnp.float32)

    # Bias fused into the residual add.
    res = xres_ref[...].astype(jnp.float32) + b_ref[...].astype(jnp.float32)
    o_ref[...] = (y + res).astype(o_ref.dtype)


@functools.partial(jax.jit, static_argnames=("tile_rows", "tile_n"))
def prenorm_residual(x, gamma, w, b, *, tile_rows=256, tile_n=None):
    """PreNormResidual with fn = Linear(dim, dim).

    x:     (..., D)
    gamma: (D,)    LayerNorm weight (bias-free LayerNorm, eps=1e-5)
    w:     (D, D)  Linear weight as (in_features, out_features) (= torch weight.T)
    b:     (D,)    Linear bias
    """
    orig_shape = x.shape
    D = orig_shape[-1]
    rows = math.prod(orig_shape[:-1])

    w_itemsize = jnp.dtype(w.dtype).itemsize
    x_itemsize = jnp.dtype(x.dtype).itemsize

    # ---- feature (N) tile: keep W resident if cheap, else tile its columns ----
    if tile_n is not None:
        tn = tile_n
    elif D % 128 != 0:
        # TODO(synk): pad D to a lane multiple (needs masked LayerNorm stats);
        # for now small/ragged feature dims use full-width blocks.
        tn = D
    elif 2 * D * D * w_itemsize <= 16 * 1024 * 1024:
        tn = D                       # whole weight resident in VMEM
    else:
        tn = next(t for t in (512, 256, 128) if D % t == 0)
    assert D % tn == 0, "tile_n must divide the feature dim"

    # ---- row (M) tile; zero-pad rows so the grid divides evenly ----
    tm = min(_round_up(tile_rows, 8), _round_up(rows, 8))
    rows_p = _round_up(rows, tm)

    x2 = x.reshape(rows, D)
    if rows_p != rows:
        x2 = jnp.pad(x2, ((0, rows_p - rows), (0, 0)))
    gamma2 = gamma.reshape(1, D)
    b2 = b.reshape(1, D)

    grid = (rows_p // tm, D // tn)

    # Advisory cost estimate so XLA schedules surrounding ops appropriately.
    w_fetches = 1 if tn == D else grid[0]
    cost = pl.CostEstimate(
        flops=2 * rows_p * D * D + 8 * rows_p * D,
        transcendentals=rows_p,
        bytes_accessed=(3 * rows_p * D * x_itemsize
                        + w_fetches * D * D * w_itemsize
                        + 2 * D * w_itemsize),
    )

    out2 = pl.pallas_call(
        _prenorm_residual_kernel,
        out_shape=jax.ShapeDtypeStruct((rows_p, D), x.dtype),
        grid_spec=pltpu.PrefetchScalarGridSpec(
            num_scalar_prefetch=0,
            grid=grid,
            in_specs=[
                pl.BlockSpec((tm, D), lambda i, j: (i, 0)),    # x (layernorm input)
                pl.BlockSpec((tm, tn), lambda i, j: (i, j)),   # x (residual tile)
                pl.BlockSpec((1, D), lambda i, j: (0, 0)),     # gamma
                pl.BlockSpec((D, tn), lambda i, j: (0, j)),    # W column tile
                pl.BlockSpec((1, tn), lambda i, j: (0, j)),    # bias tile
            ],
            out_specs=pl.BlockSpec((tm, tn), lambda i, j: (i, j)),
            scratch_shapes=[pltpu.VMEM((tm, D), w.dtype)],
        ),
        compiler_params=pltpu.CompilerParams(
            dimension_semantics=("parallel", "arbitrary"),
            vmem_limit_bytes=64 * 1024 * 1024,
        ),
        cost_estimate=cost,
    )(x2, x2, gamma2, w, b2)

    return out2[:rows].reshape(orig_shape)


def _reference(x, gamma, w, b):
    xf = x.astype(jnp.float32)
    mean = jnp.mean(xf, axis=-1, keepdims=True)
    var = jnp.mean((xf - mean) ** 2, axis=-1, keepdims=True)
    normed = (xf - mean) * jax.lax.rsqrt(var + EPS) * gamma
    return (normed @ w.astype(jnp.float32) + b + xf).astype(x.dtype)


if __name__ == "__main__":
    # D is a lane multiple (128) so output stores are lane-dense and the tiled
    # path is exercised with realistic layout.
    B, S, D = 2, 8, 128
    key = jax.random.PRNGKey(0)
    kx, kg, kw, kb = jax.random.split(key, 4)

    x = jax.random.normal(kx, (B, S, D), dtype=jnp.float32)
    # nn.LayerNorm(dim) init: weight = ones (perturbed slightly so the scale matters).
    gamma = jnp.ones((D,), jnp.float32) + 0.01 * jax.random.normal(kg, (D,), jnp.float32)
    # fn = Linear(dim, dim), weight stored as (in_features, out_features).
    w = 0.05 * jax.random.normal(kw, (D, D), dtype=jnp.float32)
    b = 0.05 * jax.random.normal(kb, (D,), dtype=jnp.float32)

    out = prenorm_residual(x, gamma, w, b)
    out = jax.block_until_ready(out)

    ref = _reference(x, gamma, w, b)
    assert out.shape == (B, S, D)
    assert jnp.allclose(out, ref, atol=5e-4, rtol=5e-4), "mismatch vs reference"

    print("KERNEL_OK")
</pallas_src>

<mosaic_0001>
module attributes {stable_mosaic.version = 11 : i64} {
  func.func @_prenorm_residual_kernel(%arg0: i32, %arg1: i32, %arg2: memref<16x128xf32, #tpu.memory_space<vmem>>, %arg3: memref<16x128xf32, #tpu.memory_space<vmem>>, %arg4: memref<1x128xf32, #tpu.memory_space<vmem>>, %arg5: memref<128x128xf32, #tpu.memory_space<vmem>>, %arg6: memref<1x128xf32, #tpu.memory_space<vmem>>, %arg7: memref<16x128xf32, #tpu.memory_space<vmem>>, %arg8: memref<16x128xf32, #tpu.memory_space<vmem>>) attributes {dimension_semantics = [#tpu.dimension_semantics<parallel>, #tpu.dimension_semantics<arbitrary>], iteration_bounds = array<i64: 1, 1>, scalar_prefetch = 0 : i64, scratch_operands = 1 : i64, tpu.core_type = #tpu.core_type<tc>, window_params = [{transform_indices = @transform_0, window_bounds = array<i64: 16, 128>}, {transform_indices = @transform_1, window_bounds = array<i64: 16, 128>}, {pipeline_mode = #tpu.pipeline_mode<synchronous>, transform_indices = @transform_2, window_bounds = array<i64: 1, 128>}, {transform_indices = @transform_3, window_bounds = array<i64: 128, 128>}, {transform_indices = @transform_4, window_bounds = array<i64: 1, 128>}, {transform_indices = @transform_5, window_bounds = array<i64: 16, 128>}]} {
    %c0_i32 = arith.constant 0 : i32
    %0 = arith.cmpi eq, %arg1, %c0_i32 : i32
    %1 = arith.extui %0 : i1 to i32
    %c0_i32_0 = arith.constant 0 : i32
    %2 = arith.cmpi ne, %1, %c0_i32_0 : i32
    scf.if %2 {
      %c0_10 = arith.constant 0 : index
      %c0_11 = arith.constant 0 : index
      %12 = vector.load %arg2[%c0_10, %c0_11] : memref<16x128xf32, #tpu.memory_space<vmem>>, vector<16x128xf32>
      %cst_12 = arith.constant dense<0.000000e+00> : vector<16xf32>
      %13 = vector.multi_reduction <add>, %12, %cst_12 [1] : vector<16x128xf32> to vector<16xf32>
      %14 = vector.shape_cast %13 : vector<16xf32> to vector<16x1xf32>
      %cst_13 = arith.constant 1.280000e+02 : f32
      %15 = vector.broadcast %cst_13 : f32 to vector<16x1xf32>
      %16 = arith.divf %14, %15 : vector<16x1xf32>
      %17 = vector.broadcast %16 : vector<16x1xf32> to vector<16x128xf32>
      %18 = arith.subf %12, %17 : vector<16x128xf32>
      %19 = arith.mulf %18, %18 : vector<16x128xf32>
      %cst_14 = arith.constant dense<0.000000e+00> : vector<16xf32>
      %20 = vector.multi_reduction <add>, %19, %cst_14 [1] : vector<16x128xf32> to vector<16xf32>
      %21 = vector.shape_cast %20 : vector<16xf32> to vector<16x1xf32>
      %cst_15 = arith.constant 1.280000e+02 : f32
      %22 = vector.broadcast %cst_15 : f32 to vector<16x1xf32>
      %23 = arith.divf %21, %22 : vector<16x1xf32>
      %cst_16 = arith.constant 9.99999974E-6 : f32
      %24 = vector.broadcast %cst_16 : f32 to vector<16x1xf32>
      %25 = arith.addf %23, %24 : vector<16x1xf32>
      %26 = math.rsqrt %25 : vector<16x1xf32>
      %c0_17 = arith.constant 0 : index
      %c0_18 = arith.constant 0 : index
      %27 = vector.load %arg4[%c0_17, %c0_18] : memref<1x128xf32, #tpu.memory_space<vmem>>, vector<1x128xf32>
      %28 = vector.broadcast %26 : vector<16x1xf32> to vector<16x128xf32>
      %29 = vector.broadcast %27 : vector<1x128xf32> to vector<16x128xf32>
      %30 = arith.mulf %28, %29 : vector<16x128xf32>
      %31 = arith.mulf %18, %30 : vector<16x128xf32>
      %c0_19 = arith.constant 0 : index
      %c0_20 = arith.constant 0 : index
      %32 = vector.load %arg8[%c0_19, %c0_20] : memref<16x128xf32, #tpu.memory_space<vmem>>, vector<16x128xf32>
      tpu.vector_store %arg8[%c0_19, %c0_20], %31 {strides = array<i32>} : memref<16x128xf32, #tpu.memory_space<vmem>>, vector<16x128xf32>,
    } else {
    }
    %c0 = arith.constant 0 : index
    %c0_1 = arith.constant 0 : index
    %3 = vector.load %arg8[%c0, %c0_1] : memref<16x128xf32, #tpu.memory_space<vmem>>, vector<16x128xf32>
    %c0_2 = arith.constant 0 : index
    %c0_3 = arith.constant 0 : index
    %4 = vector.load %arg5[%c0_2, %c0_3] : memref<128x128xf32, #tpu.memory_space<vmem>>, vector<128x128xf32>
    %cst = arith.constant dense<0.000000e+00> : vector<16x128xf32>
    %5 = tpu.matmul %3, %4, %cst {dimension_numbers = #tpu.dot_dimension_numbers<[1], [0], [0], [1], [0, 0, 1, 1], [], []>} : vector<16x128xf32>, vector<128x128xf32>, vector<16x128xf32> -> vector<16x128xf32>
    %c0_4 = arith.constant 0 : index
    %c0_5 = arith.constant 0 : index
    %6 = vector.load %arg3[%c0_4, %c0_5] : memref<16x128xf32, #tpu.memory_space<vmem>>, vector<16x128xf32>
    %c0_6 = arith.constant 0 : index
    %c0_7 = arith.constant 0 : index
    %7 = vector.load %arg6[%c0_6, %c0_7] : memref<1x128xf32, #tpu.memory_space<vmem>>, vector<1x128xf32>
    %8 = vector.broadcast %7 : vector<1x128xf32> to vector<16x128xf32>
    %9 = arith.addf %6, %8 : vector<16x128xf32>
    %10 = arith.addf %5, %9 : vector<16x128xf32>
    %c0_8 = arith.constant 0 : index
    %c0_9 = arith.constant 0 : index
    %11 = vector.load %arg7[%c0_8, %c0_9] : memref<16x128xf32, #tpu.memory_space<vmem>>, vector<16x128xf32>
    tpu.vector_store %arg7[%c0_8, %c0_9], %10 {strides = array<i32>} : memref<16x128xf32, #tpu.memory_space<vmem>>, vector<16x128xf32>,
    return
  }
  func.func @transform_0(%arg0: i32, %arg1: i32) -> (i32, i32) {
    %c0_i32 = arith.constant 0 : i32
    %c0_i32_0 = arith.constant 0 : i32
    return %arg0, %c0_i32 : i32, i32
  }
  func.func @transform_1(%arg0: i32, %arg1: i32) -> (i32, i32) {
    %c0_i32 = arith.constant 0 : i32
    return %arg0, %arg1 : i32, i32
  }
  func.func @transform_2(%arg0: i32, %arg1: i32) -> (i32, i32) {
    %c0_i32 = arith.constant 0 : i32
    %c0_i32_0 = arith.constant 0 : i32
    %c0_i32_1 = arith.constant 0 : i32
    return %c0_i32, %c0_i32_0 : i32, i32
  }
  func.func @transform_3(%arg0: i32, %arg1: i32) -> (i32, i32) {
    %c0_i32 = arith.constant 0 : i32
    %c0_i32_0 = arith.constant 0 : i32
    return %c0_i32, %arg1 : i32, i32
  }
  func.func @transform_4(%arg0: i32, %arg1: i32) -> (i32, i32) {
    %c0_i32 = arith.constant 0 : i32
    %c0_i32_0 = arith.constant 0 : i32
    return %c0_i32, %arg1 : i32, i32
  }
  func.func @transform_5(%arg0: i32, %arg1: i32) -> (i32, i32) {
    %c0_i32 = arith.constant 0 : i32
    return %arg0, %arg1 : i32, i32
  }
}

</mosaic_0001>

<llo_original>
// kernel: prenorm_residual.1
$region0: #{prenorm_residual.1}
  #allocation0 [shape = 'u32[]', space=smem, size = 0x4, offset = 0x4, fixed_abs, tag = 'smem constant byte address 0x4 - core index']
  #allocation1 [shape = 'u32[144,128]{1,0:T(1,128)}', space=vmem, size = 0x12000, scoped, tag = 'internal scratch']
  #allocation2 [shape = 'f32[16,128]{1,0:T(8,128)}', space=vmem, size = 0x2000, scoped, tag = 'scratch operand']
  %s0 = inlined_call_operand.hbm [shape: f32[16,128], index: 0, kind: input, shape index: {}, may-alias: {0,1}]
  %s1 = inlined_call_operand.hbm [shape: f32[16,128], index: 1, kind: input, shape index: {}, may-alias: {0,1}]
  %s2 = inlined_call_operand.hbm [shape: f32[1,128], index: 2, kind: input, shape index: {}]
  %s3 = inlined_call_operand.hbm [shape: f32[128,128], index: 3, kind: input, shape index: {}]
  %s4 = inlined_call_operand.hbm [shape: f32[1,128], index: 4, kind: input, shape index: {}]
  %s5 = inlined_call_operand.hbm [shape: f32[16,128], index: 5, kind: output, shape index: {}]
  %s6 = sld [smem:[#allocation0]]
  $region54: #{prenorm_residual.1} parent=0
    _
  %s8 = ssub.s32 1, %s6
  %s9 = scalar_select 0, %s8, %s6
  $region1: #{prenorm_residual.1} parent=0
    #allocation3 [shape = 'u8[8192]{0}', space=vmem, size = 0x2000, scoped, tag = 'input window, operand 0, single buffered']
    #allocation4 [shape = 's32[1]{0}', space=sflag, size = 0x4, scoped, tag = 'scoped memory for prenorm_residual.1']
    #allocation5 [shape = 's32[1]{0}', space=sflag, size = 0x4, scoped, tag = 'scoped memory for prenorm_residual.1']
    #allocation6 [shape = 'u8[8192]{0}', space=vmem, size = 0x2000, scoped, tag = 'input window, operand 1, single buffered']
    #allocation7 [shape = 's32[1]{0}', space=sflag, size = 0x4, scoped, tag = 'scoped memory for prenorm_residual.1']
    #allocation8 [shape = 'u8[512]{0}', space=vmem, size = 0x400, scoped, tag = 'input window, operand 2, single buffered']
    #allocation9 [shape = 'u8[65536]{0}', space=vmem, size = 0x10000, scoped, tag = 'input window, operand 3, single buffered']
    #allocation10 [shape = 's32[1]{0}', space=sflag, size = 0x4, scoped, tag = 'scoped memory for prenorm_residual.1']
    #allocation11 [shape = 'u8[512]{0}', space=vmem, size = 0x400, scoped, tag = 'input window, operand 4, single buffered']
    #allocation12 [shape = 'u8[8192]{0}', space=vmem, size = 0x2000, scoped, tag = 'output window, operand 0, single buffered']
    %10 = vsyncpa [#allocation4], 0
    %11 = vsyncpa [#allocation7], 0
    %12 = vsyncpa [#allocation10], 0
    %13 = vsyncpa [#allocation5], 0
    // Predicated region
    $region2: #{prenorm_residual.1} parent=1 // pred_check
      _
    $region3: #{prenorm_residual.1} parent=1 // pred_check_branch
      %15 = sbr.rel (0) target = $region5
    $region4: #{prenorm_residual.1} parent=1 // pred_region
      %s17 = ssub.s32 256, 256
      %18 = vsyncadd [#allocation4], %s17
      %s19 = sshll.u32 [#allocation3], 4
      %s20 = int_to_ptr.vmem [resolvable:$true] %s19
      %25 = dma.hbm_to_vmem [thread:$0]  %s0, 256, %s20, [#allocation4], 128, 128, 8
    $region5: #{prenorm_residual.1} parent=1 // pred_fallthru
      _
    // Predicated region
    $region6: #{prenorm_residual.1} parent=1 // pred_check
      _
    $region7: #{prenorm_residual.1} parent=1 // pred_check_branch
      %27 = sbr.rel (0) target = $region9
    $region8: #{prenorm_residual.1} parent=1 // pred_region
      %s29 = ssub.s32 256, 256
      %30 = vsyncadd [#allocation7], %s29
      %s31 = sshll.u32 [#allocation6], 4
      %s32 = int_to_ptr.vmem [resolvable:$true] %s31
      %37 = dma.hbm_to_vmem [thread:$0]  %s1, 256, %s32, [#allocation7], 128, 128, 8
    $region9: #{prenorm_residual.1} parent=1 // pred_fallthru
      _
    // Predicated region
    $region10: #{prenorm_residual.1} parent=1 // pred_check
      _
    $region11: #{prenorm_residual.1} parent=1 // pred_check_branch
      %39 = sbr.rel (0) target = $region13
    $region12: #{prenorm_residual.1} parent=1 // pred_region
      %s41 = ssub.s32 16, 16
      %42 = vsyncadd [#allocation7], %s41
      %s44 = sshll.u32 [#allocation8], 4
      %s45 = int_to_ptr.vmem [resolvable:$true] %s44
      %47 = dma.hbm_to_vmem [thread:$0]  %s2, 16, %s45, [#allocation7]
    $region13: #{prenorm_residual.1} parent=1 // pred_fallthru
      _
    // Predicated region
    $region14: #{prenorm_residual.1} parent=1 // pred_check
      _
    $region15: #{prenorm_residual.1} parent=1 // pred_check_branch
      %49 = sbr.rel (0) target = $region17
    $region16: #{prenorm_residual.1} parent=1 // pred_region
      %s51 = ssub.s32 2048, 2048
      %52 = vsyncadd [#allocation10], %s51
      %s53 = sshll.u32 [#allocation9], 4
      %s54 = int_to_ptr.vmem [resolvable:$true] %s53
      %59 = dma.hbm_to_vmem [thread:$0]  %s3, 2048, %s54, [#allocation10], 128, 128, 8
    $region17: #{prenorm_residual.1} parent=1 // pred_fallthru
      _
    // Predicated region
    $region18: #{prenorm_residual.1} parent=1 // pred_check
      _
    $region19: #{prenorm_residual.1} parent=1 // pred_check_branch
      %61 = sbr.rel (0) target = $region21
    $region20: #{prenorm_residual.1} parent=1 // pred_region
      %s63 = ssub.s32 16, 16
      %64 = vsyncadd [#allocation10], %s63
      %s66 = sshll.u32 [#allocation11], 4
      %s67 = int_to_ptr.vmem [resolvable:$true] %s66
      %69 = dma.hbm_to_vmem [thread:$0]  %s4, 16, %s67, [#allocation10]
    $region21: #{prenorm_residual.1} parent=1 // pred_fallthru
      _
    // Predicated region
    $region22: #{prenorm_residual.1} parent=1 // pred_check
      _
    $region23: #{prenorm_residual.1} parent=1 // pred_check_branch
      %71 = sbr.rel (0) target = $region25
    $region24: #{prenorm_residual.1} parent=1 // pred_region
      %72 = dma.done [#allocation4], 256
    $region25: #{prenorm_residual.1} parent=1 // pred_fallthru
      _
    // Predicated region
    $region26: #{prenorm_residual.1} parent=1 // pred_check
      _
    $region27: #{prenorm_residual.1} parent=1 // pred_check_branch
      %74 = sbr.rel (0) target = $region29
    $region28: #{prenorm_residual.1} parent=1 // pred_region
      %75 = dma.done [#allocation7], 256
    $region29: #{prenorm_residual.1} parent=1 // pred_fallthru
      _
    // Predicated region
    $region30: #{prenorm_residual.1} parent=1 // pred_check
      _
    $region31: #{prenorm_residual.1} parent=1 // pred_check_branch
      %77 = sbr.rel (0) target = $region33
    $region32: #{prenorm_residual.1} parent=1 // pred_region
      %78 = dma.done [#allocation7], 16
    $region33: #{prenorm_residual.1} parent=1 // pred_fallthru
      _
    // Predicated region
    $region34: #{prenorm_residual.1} parent=1 // pred_check
      _
    $region35: #{prenorm_residual.1} parent=1 // pred_check_branch
      %80 = sbr.rel (0) target = $region37
    $region36: #{prenorm_residual.1} parent=1 // pred_region
      %81 = dma.done [#allocation10], 2048
    $region37: #{prenorm_residual.1} parent=1 // pred_fallthru
      _
    // Predicated region
    $region38: #{prenorm_residual.1} parent=1 // pred_check
      _
    $region39: #{prenorm_residual.1} parent=1 // pred_check_branch
      %83 = sbr.rel (0) target = $region41
    $region40: #{prenorm_residual.1} parent=1 // pred_region
      %84 = dma.done [#allocation10], 16
    $region41: #{prenorm_residual.1} parent=1 // pred_fallthru
      _
    %p85 = scmp.eq.s32.totalorder 0, 0
    // Predicated region
    $region42: #{prenorm_residual.1} parent=1 // pred_check
      %p86 = pneg %p85
    $region43: #{prenorm_residual.1} parent=1 // pred_check_branch
      %88 = sbr.rel (%p86) target = $region45
    $region44: #{prenorm_residual.1} parent=1 // pred_region
      %v89 = vld [vmem:[#allocation3] sm:$0xff]
      %v90 = vld [vmem:[#allocation3 + $0x8] sm:$0xff]
      %91 = vadd.xlane.f32.xlu0 %v89
      %v92 = vpop.xlane.xlu0 %91
      %93 = vadd.xlane.f32.xlu0 %v90
      %v94 = vpop.xlane.xlu0 %93
      %v95 = vrcp.pop 128.0
      %v96 = vmul.f32 %v92, %v95
      %v97 = vmul.f32 %v94, %v95
      %v98 = vsub.f32 %v89, %v96
      %v99 = vsub.f32 %v90, %v97
      %v100 = vmul.f32 %v98, %v98
      %v101 = vmul.f32 %v99, %v99
      %102 = vadd.xlane.f32.xlu0 %v100
      %v103 = vpop.xlane.xlu0 %102
      %104 = vadd.xlane.f32.xlu0 %v101
      %v105 = vpop.xlane.xlu0 %104
      %v106 = vmul.f32 %v103, %v95
      %v107 = vmul.f32 %v105, %v95
      %v108 = vadd.f32 %v106, 1e-05
      %v109 = vadd.f32 %v107, 1e-05
      %v110 = vrsqrt.pop %v108
      %v111 = vrsqrt.pop %v109
      %v112 = vld [vmem:[#allocation8] sm:$0x1]
      %v114 = vlaneseq
      %v115 = vshrl.u32 %v114, 7
      %v116 = vsub.s32 0, %v115
      %v117 = vrot.slane %v112, %v116
      %v119 = vmul.f32 %v110, %v117
      %v120 = vmul.f32 %v111, %v117
      %v121 = vmul.f32 %v98, %v119
      %v122 = vmul.f32 %v99, %v120
      %123 = vst [vmem:[#allocation2] sm:$0xff] %v121
      %124 = vst [vmem:[#allocation2 + $0x8] sm:$0xff] %v122
    $region45: #{prenorm_residual.1} parent=1 // pred_fallthru
      _
    %v125 = vld [vmem:[#allocation2] sm:$0xff]
    %v126 = vld [vmem:[#allocation2 + $0x8] sm:$0xff]
    %v127 = vld [vmem:[#allocation9] sm:$0xff]
    %v128 = vld [vmem:[#allocation9 + $0x8] sm:$0xff]
    %v129 = vld [vmem:[#allocation9 + $0x10] sm:$0xff]
    %v130 = vld [vmem:[#allocation9 + $0x18] sm:$0xff]
    %v131 = vld [vmem:[#allocation9 + $0x20] sm:$0xff]
    %v132 = vld [vmem:[#allocation9 + $0x28] sm:$0xff]
    %v133 = vld [vmem:[#allocation9 + $0x30] sm:$0xff]
    %v134 = vld [vmem:[#allocation9 + $0x38] sm:$0xff]
    %v135 = vld [vmem:[#allocation9 + $0x40] sm:$0xff]
    %v136 = vld [vmem:[#allocation9 + $0x48] sm:$0xff]
    %v137 = vld [vmem:[#allocation9 + $0x50] sm:$0xff]
    %v138 = vld [vmem:[#allocation9 + $0x58] sm:$0xff]
    %v139 = vld [vmem:[#allocation9 + $0x60] sm:$0xff]
    %v140 = vld [vmem:[#allocation9 + $0x68] sm:$0xff]
    %v141 = vld [vmem:[#allocation9 + $0x70] sm:$0xff]
    %v142 = vld [vmem:[#allocation9 + $0x78] sm:$0xff]
    %v143 = vld [vmem:[#allocation6] sm:$0xff]
    %v144 = vld [vmem:[#allocation6 + $0x8] sm:$0xff]
    %v145 = vld [vmem:[#allocation11] sm:$0x1]
    %v147 = vlaneseq
    %v148 = vshrl.u32 %v147, 7
    %v149 = vsub.s32 0, %v148
    %v150 = vrot.slane %v145, %v149
    %v152 = vadd.f32 %v143, %v150
    %v153 = vadd.f32 %v144, %v150
    %154 = vmatprep.subr.mxu0 0.0
    %155 = vmatpush1.msra.mxu0 %v127
    %156 = vmatprep.subr.mxu0 0.0
    %157 = vmatpush1.msra.mxu0 %v128
    %158 = vmatprep.subr.mxu0 0.0
    %159 = vmatpush1.msra.mxu0 %v129
    %160 = vmatprep.subr.mxu0 0.0
    %161 = vmatpush1.msra.mxu0 %v130
    %162 = vmatprep.subr.mxu0 0.0
    %163 = vmatpush1.msra.mxu0 %v131
    %164 = vmatprep.subr.mxu0 0.0
    %165 = vmatpush1.msra.mxu0 %v132
    %166 = vmatprep.subr.mxu0 0.0
    %167 = vmatpush1.msra.mxu0 %v133
    %168 = vmatprep.subr.mxu0 0.0
    %169 = vmatpush1.msra.mxu0 %v134
    %170 = vmatprep.subr.mxu0 0.0
    %171 = vmatpush1.msra.mxu0 %v135
    %172 = vmatprep.subr.mxu0 0.0
    %173 = vmatpush1.msra.mxu0 %v136
    %174 = vmatprep.subr.mxu0 0.0
    %175 = vmatpush1.msra.mxu0 %v137
    %176 = vmatprep.subr.mxu0 0.0
    %177 = vmatpush1.msra.mxu0 %v138
    %178 = vmatprep.subr.mxu0 0.0
    %179 = vmatpush1.msra.mxu0 %v139
    %180 = vmatprep.subr.mxu0 0.0
    %181 = vmatpush1.msra.mxu0 %v140
    %182 = vmatprep.subr.mxu0 0.0
    %183 = vmatpush1.msra.mxu0 %v141
    %184 = vmatprep.subr.mxu0 0.0
    %185 = vmatpush1.msra.mxu0 %v142
    %186 = vmatprep.subr.mxu0 0.0
    %187 = vmatpush1.msra.mxu0 0.0
    %188 = vmatprep.subr.mxu0 0.0
    %189 = vmatpush1.msra.mxu0 0.0
    %190 = vmatprep.subr.mxu0 0.0
    %191 = vmatpush1.msra.mxu0 0.0
    %192 = vmatprep.subr.mxu0 0.0
    %193 = vmatpush1.msra.mxu0 0.0
    %194 = vmatprep.subr.mxu0 0.0
    %195 = vmatpush1.msra.mxu0 0.0
    %196 = vmatprep.subr.mxu0 0.0
    %197 = vmatpush1.msra.mxu0 0.0
    %198 = vmatprep.subr.mxu0 0.0
    %199 = vmatpush1.msra.mxu0 0.0
    %200 = vmatprep.subr.mxu0 0.0
    %201 = vmatpush1.msra.mxu0 0.0
    %202 = vmatprep.subr.mxu0 0.0
    %203 = vmatpush1.msra.mxu0 0.0
    %204 = vmatprep.subr.mxu0 0.0
    %205 = vmatpush1.msra.mxu0 0.0
    %206 = vmatprep.subr.mxu0 0.0
    %207 = vmatpush1.msra.mxu0 0.0
    %208 = vmatprep.subr.mxu0 0.0
    %209 = vmatpush1.msra.mxu0 0.0
    %210 = vmatprep.subr.mxu0 0.0
    %211 = vmatpush1.msra.mxu0 0.0
    %212 = vmatprep.subr.mxu0 0.0
    %213 = vmatpush1.msra.mxu0 0.0
    %214 = vmatprep.subr.mxu0 0.0
    %215 = vmatpush1.msra.mxu0 0.0
    %216 = vmatprep.subr.mxu0 0.0
    %217 = vmatpush1.msra.mxu0 0.0
    %218 = vmatprep.mubr.f32.mxu0 0.0
    %219 = vmatmul.mubr.f32.gmra.mrb[0].mxu0 %v125
    %v220 = vpop.f32.mrb[0].mxu0
    %v221 = vadd.f32 %v152, %v220
    %v222 = vpop.f32.mrb[0].mxu0
    %223 = vmatprep.mubr.f32.mxu0 0.0
    %224 = vmatmul.mubr.f32.gmra.mrb[0].mxu0 %v126
    %v225 = vpop.f32.mrb[0].mxu0
    %v226 = vadd.f32 %v153, %v225
    %v227 = vpop.f32.mrb[0].mxu0
    %228 = vdwg.mxu0
    %229 = vst [vmem:[#allocation12] sm:$0xff] %v221
    %230 = vst [vmem:[#allocation12 + $0x8] sm:$0xff] %v226
    // Predicated region
    $region46: #{prenorm_residual.1} parent=1 // pred_check
      _
    $region47: #{prenorm_residual.1} parent=1 // pred_check_branch
      %232 = sbr.rel (0) target = $region49
    $region48: #{prenorm_residual.1} parent=1 // pred_region
      %s234 = ssub.s32 256, 256
      %235 = vsyncadd [#allocation5], %s234
      %s236 = sshll.u32 [#allocation12], 4
      %s237 = int_to_ptr.vmem [resolvable:$true] %s236
      %242 = dma.vmem_to_hbm [thread:$0]  %s237, 256, %s5, [#allocation5], 128, 128, 8
    $region49: #{prenorm_residual.1} parent=1 // pred_fallthru
      _
    // Predicated region
    $region50: #{prenorm_residual.1} parent=1 // pred_check
      _
    $region51: #{prenorm_residual.1} parent=1 // pred_check_branch
      %244 = sbr.rel (0) target = $region53
    $region52: #{prenorm_residual.1} parent=1 // pred_region
      %245 = dma.done [#allocation5], 256
    $region53: #{prenorm_residual.1} parent=1 // pred_fallthru
      _
    %246 = vsyncpa [#allocation4], 1
    %247 = vsyncpa [#allocation7], 1
    %248 = vsyncpa [#allocation10], 1
    %249 = vsyncpa [#allocation5], 1

</llo_original>
